<compile_context>
chip_gen: v5e
topology: v5e:2x2
jax: 0.10.0
libtpu: 0.0.40
codegen_flags: <defaults>
</compile_context>

<pallas_src>
import functools

import numpy as np
import jax
import jax.numpy as jnp
from jax.experimental import pallas as pl
from jax.experimental.pallas import tpu as pltpu

# DFT weights dtype.  bf16 halves the dominant DMA and uses the native MXU
# path; set to jnp.float32 if a tighter-than-1e-2 match is required.
_SPECTRAL_DTYPE = jnp.bfloat16
_INV_LN10 = float(1.0 / np.log(10.0))


def _round_up(x, m):
    return (x + m - 1) // m * m


@functools.lru_cache(maxsize=16)
def _snr_constants_np(T, fps):
    """Host precompute (cached per (T, fps)):
    C = (I - 11^T/T) @ diag(hann) @ [cos | sin] at the 0.5-2.67 Hz rfft bins
    (lane-padded to a multiple of 128, pads are zero), plus the band
    frequencies replicated over 8 sublanes (padded lanes = 1e9)."""
    nyquist = fps / 2.0
    nfft = int(np.ceil(60 * 2 * nyquist / 0.5))

    n = np.arange(T, dtype=np.float64)
    win = 0.5 * (1.0 - np.cos(2.0 * np.pi * n / T))          # periodic Hann

    freqs_all = np.arange(nfft // 2 + 1, dtype=np.float64) * (fps / nfft)
    band = np.where((freqs_all > 0.5) & (freqs_all < 2.67))[0]
    F = len(band)
    Fp = _round_up(F, 128)

    ang = 2.0 * np.pi * np.outer(n, band.astype(np.float64)) / nfft   # [T, F]
    M = np.zeros((T, 2 * Fp), np.float64)
    M[:, :F] = np.cos(ang)
    M[:, Fp:Fp + F] = np.sin(ang)

    WM = win[:, None] * M                                    # fold Hann window
    C = WM - WM.mean(axis=0, keepdims=True)                  # fold constant detrend
    # Welch density scale dropped on purpose: it cancels in the SNR ratio and
    # does not affect the spectral-peak pick.

    freqs_p = np.full((8, Fp), 1e9, np.float64)              # pads never win min
    freqs_p[:, :F] = freqs_all[band][None, :]
    return C.astype(_SPECTRAL_DTYPE), freqs_p.astype(np.float32), Fp


def _make_kernel(B, TB, Fp):
    """Per grid step i (batch block of TB rows):
       t_ref [TB, T] f32   targets block
       p_ref [TB, T] f32   predictions block
       c_ref [T, 2Fp] bf16 folded detrend+Hann+DFT matrix (VMEM resident)
       f_ref [8, Fp]  f32  band frequencies (pads = 1e9, VMEM resident)
       out_ref [1, 8, 128] f32 per-block partials in lane 0 of each sublane:
         [sum(d^2), sum(p), sum(t), sum(p*t), sum(p^2), sum(t^2), sum(snr), 0]
    """
    def kernel(t_ref, p_ref, c_ref, f_ref, out_ref):
        t = t_ref[...]                                       # [TB, T] f32
        p = p_ref[...]

        def rsum(v):                                         # full reduce -> (1, 1)
            return jnp.sum(jnp.sum(v, axis=1, keepdims=True), axis=0,
                           keepdims=True)

        # ---------------- MSE / neg-Pearson raw partial sums (f32) ----------
        d = p - t
        sum_d2 = rsum(d * d)
        sx, sy = rsum(p), rsum(t)                            # x=pred, y=targ
        sxy = rsum(p * t)
        sx2, sy2 = rsum(p * p), rsum(t * t)

        # ---------------- de Haan SNR: bf16 MXU dot vs resident DFT ---------
        c = c_ref[...]                                       # [T, 2Fp] bf16
        spec_t = jnp.dot(t.astype(c.dtype), c,
                         preferred_element_type=jnp.float32)  # [TB, 2Fp]
        spec_p = jnp.dot(p.astype(c.dtype), c,
                         preferred_element_type=jnp.float32)
        psd_t = spec_t[:, :Fp] * spec_t[:, :Fp] + spec_t[:, Fp:] * spec_t[:, Fp:]
        psd_p = spec_p[:, :Fp] * spec_p[:, :Fp] + spec_p[:, Fp:] * spec_p[:, Fp:]

        fb = f_ref[0:1, :]                                   # [1, Fp], pads 1e9
        max_t = jnp.max(psd_t, axis=1, keepdims=True)        # [TB, 1]
        # first-occurrence argmax == min matching frequency (freqs increasing;
        # padded lanes have freq=1e9 and psd=0 so they never win).
        fT = jnp.min(jnp.where(psd_t >= max_t, fb, jnp.float32(1e9)),
                     axis=1, keepdims=True)                  # [TB, 1]

        # GT mask: +/-0.1 Hz around HR and +/-0.2 Hz around 1st harmonic.
        gt = jnp.logical_or(
            jnp.logical_and(fb >= fT - 0.1, fb <= fT + 0.1),
            jnp.logical_and(fb >= 2.0 * fT - 0.2, fb <= 2.0 * fT + 0.2))
        s_power = jnp.sum(jnp.where(gt, psd_p, 0.0), axis=1, keepdims=True)
        total_p = jnp.sum(psd_p, axis=1, keepdims=True)
        a_power = total_p - s_power          # exact: padded lanes are zero
        # NOTE: like the torch reference, no epsilon: a_power == 0 -> inf/NaN.
        snr_rows = jnp.log(s_power / a_power) * _INV_LN10    # log10 ratio [TB,1]

        # Mask rows that are zero-padding of the batch (0/0 -> NaN otherwise).
        row_ids = (jax.lax.broadcasted_iota(jnp.int32, (TB, 1), 0)
                   + pl.program_id(0) * TB)
        snr_sum = jnp.sum(jnp.where(row_ids < B, snr_rows, 0.0),
                          axis=0, keepdims=True)             # (1, 1)

        # Pack the 7 partial scalars into one (8, 128) tile (lane 0 used).
        sub = jax.lax.broadcasted_iota(jnp.int32, (8, 128), 0)
        acc = jnp.zeros((8, 128), jnp.float32)
        for k, v in enumerate([sum_d2, sx, sy, sxy, sx2, sy2, snr_sum]):
            acc = jnp.where(sub == k, v, acc)
        out_ref[0, :, :] = acc

    return kernel


@functools.partial(jax.jit, static_argnames=("fps",))
def _combined_loss(predictions, targets, fps):
    predictions = jnp.squeeze(predictions).astype(jnp.float32)
    targets = jnp.squeeze(targets).astype(jnp.float32)
    if predictions.ndim == 1:
        predictions = predictions[None, :]
        targets = targets[None, :]
    B, T = predictions.shape
    assert T < 256, "only the single-Welch-segment case (T < 256) is implemented"

    C_np, freqs_np, Fp = _snr_constants_np(T, fps)           # cached host precompute

    # Batch grid: blocks of <= 256 rows, padded to a multiple of 8 sublanes.
    nb = -(-B // 256)
    TB = _round_up(-(-B // nb), 8)
    Bp = nb * TB
    if Bp != B:
        predictions = jnp.pad(predictions, ((0, Bp - B), (0, 0)))
        targets = jnp.pad(targets, ((0, Bp - B), (0, 0)))

    parts = pl.pallas_call(
        _make_kernel(B, TB, Fp),
        out_shape=jax.ShapeDtypeStruct((nb, 8, 128), jnp.float32),
        grid_spec=pltpu.PrefetchScalarGridSpec(
            num_scalar_prefetch=0,
            grid=(nb,),
            in_specs=[
                pl.BlockSpec((TB, T), lambda i: (i, 0)),       # targets block
                pl.BlockSpec((TB, T), lambda i: (i, 0)),       # predictions block
                pl.BlockSpec((T, 2 * Fp), lambda i: (0, 0)),   # C: VMEM-resident
                pl.BlockSpec((8, Fp), lambda i: (0, 0)),       # freqs: resident
            ],
            out_specs=pl.BlockSpec((1, 8, 128), lambda i: (i, 0, 0)),
        ),
        compiler_params=pltpu.CompilerParams(
            dimension_semantics=("parallel",)),
    )(targets, predictions, jnp.asarray(C_np), jnp.asarray(freqs_np))

    # Tiny cross-block reduce + scalar combine (fused under jit).
    tot = jnp.sum(parts[:, :, 0], axis=0)                    # [8]
    n_flat = jnp.float32(B * T)
    mse = tot[0] / n_flat
    num = n_flat * tot[3] - tot[1] * tot[2]
    den = (n_flat * tot[4] - tot[1] * tot[1]) * (n_flat * tot[5] - tot[2] * tot[2])
    pearson_loss = 1.0 - num * jax.lax.rsqrt(den)            # raw-sum form, like torch
    snr_loss = -tot[6] / jnp.float32(B)
    return mse + pearson_loss + snr_loss


def new_combined_loss_pallas(predictions, targets, fps):
    if not isinstance(fps, (int, np.integer)):
        fps = int(np.asarray(fps).reshape(-1)[0])
    return _combined_loss(predictions, targets, fps=int(fps))


def new_combined_loss_ref(predictions, targets, fps):
    """Pure numpy reference: MSE + de Haan SNR (single Welch segment) + neg Pearson."""
    p = np.asarray(predictions, np.float64)
    t = np.asarray(targets, np.float64)
    B, T = p.shape

    mse = np.mean((p - t) ** 2)

    x = p.reshape(-1)
    y = t.reshape(-1)
    n = x.size
    pearson = (n * np.sum(x * y) - x.sum() * y.sum()) / np.sqrt(
        (n * np.sum(x * x) - x.sum() ** 2) * (n * np.sum(y * y) - y.sum() ** 2))
    pearson_loss = 1.0 - pearson

    nfft = int(np.ceil(60 * 2 * (fps / 2.0) / 0.5))
    k = np.arange(T)
    win = 0.5 * (1.0 - np.cos(2.0 * np.pi * k / T))
    freqs_all = np.arange(nfft // 2 + 1) * (fps / nfft)
    band = (freqs_all > 0.5) & (freqs_all < 2.67)
    fband = freqs_all[band]

    def psd(z):
        zd = (z - z.mean(axis=1, keepdims=True)) * win
        Z = np.fft.rfft(zd, nfft, axis=1)[:, band]
        return 2.0 * np.abs(Z) ** 2 / (fps * np.sum(win ** 2))

    psd_t, psd_p = psd(t), psd(p)
    snr_sum = 0.0
    for b in range(B):
        fT = fband[np.argmax(psd_t[b])]
        g = ((fband >= fT - 0.1) & (fband <= fT + 0.1)) | \
            ((fband >= 2 * fT - 0.2) & (fband <= 2 * fT + 0.2))
        snr_sum += np.log10(psd_p[b][g].sum() / psd_p[b][~g].sum())
    snr_loss = -snr_sum / B

    return mse + snr_loss + pearson_loss


if __name__ == "__main__":
    B, T, FPS = 2, 240, 30
    key = jax.random.PRNGKey(0)
    k1, k2 = jax.random.split(key)

    tgrid = jnp.arange(T, dtype=jnp.float32) / FPS
    hr = jnp.array([1.2, 1.6], dtype=jnp.float32)            # "heart rates" in Hz
    targets = jnp.sin(2.0 * jnp.pi * hr[:, None] * tgrid[None, :]) \
        + 0.05 * jax.random.normal(k1, (B, T), jnp.float32)
    predictions = targets + 0.3 * jax.random.normal(k2, (B, T), jnp.float32)

    loss = new_combined_loss_pallas(predictions, targets, FPS)
    loss = jax.block_until_ready(loss)

    # Second call hits the cached constants + jit executable (no re-upload).
    loss2 = jax.block_until_ready(new_combined_loss_pallas(predictions, targets, FPS))

    ref = new_combined_loss_ref(np.asarray(predictions), np.asarray(targets), FPS)
    # Slightly looser atol than the f32 variant to absorb the bf16 DFT weights.
    np.testing.assert_allclose(float(loss), float(ref), rtol=1e-2, atol=2e-2)
    np.testing.assert_allclose(float(loss), float(loss2), rtol=0, atol=1e-6)

    print("KERNEL_OK")
</pallas_src>

<mosaic_0001>
module attributes {stable_mosaic.version = 11 : i64} {
  func.func @kernel(%arg0: i32, %arg1: memref<8x240xf32, #tpu.memory_space<vmem>>, %arg2: memref<8x240xf32, #tpu.memory_space<vmem>>, %arg3: memref<240x768xbf16, #tpu.memory_space<vmem>>, %arg4: memref<8x384xf32, #tpu.memory_space<vmem>>, %arg5: memref<1x8x128xf32, #tpu.memory_space<vmem>>) attributes {dimension_semantics = [#tpu.dimension_semantics<parallel>], iteration_bounds = array<i64: 1>, scalar_prefetch = 0 : i64, scratch_operands = 0 : i64, tpu.core_type = #tpu.core_type<tc>, window_params = [{transform_indices = @transform_0, window_bounds = array<i64: 8, 240>}, {transform_indices = @transform_1, window_bounds = array<i64: 8, 240>}, {pipeline_mode = #tpu.pipeline_mode<synchronous>, transform_indices = @transform_2, window_bounds = array<i64: 240, 768>}, {pipeline_mode = #tpu.pipeline_mode<synchronous>, transform_indices = @transform_3, window_bounds = array<i64: 8, 384>}, {transform_indices = @transform_4, window_bounds = array<i64: 1, 8, 128>}]} {
    %c0 = arith.constant 0 : index
    %c0_0 = arith.constant 0 : index
    %0 = vector.load %arg1[%c0, %c0_0] : memref<8x240xf32, #tpu.memory_space<vmem>>, vector<8x240xf32>
    %c0_1 = arith.constant 0 : index
    %c0_2 = arith.constant 0 : index
    %1 = vector.load %arg2[%c0_1, %c0_2] : memref<8x240xf32, #tpu.memory_space<vmem>>, vector<8x240xf32>
    %2 = arith.subf %1, %0 : vector<8x240xf32>
    %3 = arith.mulf %2, %2 : vector<8x240xf32>
    %cst = arith.constant dense<0.000000e+00> : vector<8xf32>
    %4 = vector.multi_reduction <add>, %3, %cst [1] : vector<8x240xf32> to vector<8xf32>
    %5 = vector.shape_cast %4 : vector<8xf32> to vector<8x1xf32>
    %cst_3 = arith.constant dense<0.000000e+00> : vector<1xf32>
    %6 = vector.multi_reduction <add>, %5, %cst_3 [0] : vector<8x1xf32> to vector<1xf32>
    %7 = vector.shape_cast %6 : vector<1xf32> to vector<1x1xf32>
    %cst_4 = arith.constant dense<0.000000e+00> : vector<8xf32>
    %8 = vector.multi_reduction <add>, %1, %cst_4 [1] : vector<8x240xf32> to vector<8xf32>
    %9 = vector.shape_cast %8 : vector<8xf32> to vector<8x1xf32>
    %cst_5 = arith.constant dense<0.000000e+00> : vector<1xf32>
    %10 = vector.multi_reduction <add>, %9, %cst_5 [0] : vector<8x1xf32> to vector<1xf32>
    %11 = vector.shape_cast %10 : vector<1xf32> to vector<1x1xf32>
    %cst_6 = arith.constant dense<0.000000e+00> : vector<8xf32>
    %12 = vector.multi_reduction <add>, %0, %cst_6 [1] : vector<8x240xf32> to vector<8xf32>
    %13 = vector.shape_cast %12 : vector<8xf32> to vector<8x1xf32>
    %cst_7 = arith.constant dense<0.000000e+00> : vector<1xf32>
    %14 = vector.multi_reduction <add>, %13, %cst_7 [0] : vector<8x1xf32> to vector<1xf32>
    %15 = vector.shape_cast %14 : vector<1xf32> to vector<1x1xf32>
    %16 = arith.mulf %1, %0 : vector<8x240xf32>
    %cst_8 = arith.constant dense<0.000000e+00> : vector<8xf32>
    %17 = vector.multi_reduction <add>, %16, %cst_8 [1] : vector<8x240xf32> to vector<8xf32>
    %18 = vector.shape_cast %17 : vector<8xf32> to vector<8x1xf32>
    %cst_9 = arith.constant dense<0.000000e+00> : vector<1xf32>
    %19 = vector.multi_reduction <add>, %18, %cst_9 [0] : vector<8x1xf32> to vector<1xf32>
    %20 = vector.shape_cast %19 : vector<1xf32> to vector<1x1xf32>
    %21 = arith.mulf %1, %1 : vector<8x240xf32>
    %cst_10 = arith.constant dense<0.000000e+00> : vector<8xf32>
    %22 = vector.multi_reduction <add>, %21, %cst_10 [1] : vector<8x240xf32> to vector<8xf32>
    %23 = vector.shape_cast %22 : vector<8xf32> to vector<8x1xf32>
    %cst_11 = arith.constant dense<0.000000e+00> : vector<1xf32>
    %24 = vector.multi_reduction <add>, %23, %cst_11 [0] : vector<8x1xf32> to vector<1xf32>
    %25 = vector.shape_cast %24 : vector<1xf32> to vector<1x1xf32>
    %26 = arith.mulf %0, %0 : vector<8x240xf32>
    %cst_12 = arith.constant dense<0.000000e+00> : vector<8xf32>
    %27 = vector.multi_reduction <add>, %26, %cst_12 [1] : vector<8x240xf32> to vector<8xf32>
    %28 = vector.shape_cast %27 : vector<8xf32> to vector<8x1xf32>
    %cst_13 = arith.constant dense<0.000000e+00> : vector<1xf32>
    %29 = vector.multi_reduction <add>, %28, %cst_13 [0] : vector<8x1xf32> to vector<1xf32>
    %30 = vector.shape_cast %29 : vector<1xf32> to vector<1x1xf32>
    %c0_14 = arith.constant 0 : index
    %c0_15 = arith.constant 0 : index
    %31 = vector.load %arg3[%c0_14, %c0_15] : memref<240x768xbf16, #tpu.memory_space<vmem>>, vector<240x768xbf16>
    %32 = arith.truncf %0 : vector<8x240xf32> to vector<8x240xbf16>
    %cst_16 = arith.constant dense<0.000000e+00> : vector<8x768xf32>
    %33 = tpu.matmul %32, %31, %cst_16 {dimension_numbers = #tpu.dot_dimension_numbers<[1], [0], [0], [1], [0, 0, 1, 1], [], []>} : vector<8x240xbf16>, vector<240x768xbf16>, vector<8x768xf32> -> vector<8x768xf32>
    %34 = arith.truncf %1 : vector<8x240xf32> to vector<8x240xbf16>
    %cst_17 = arith.constant dense<0.000000e+00> : vector<8x768xf32>
    %35 = tpu.matmul %34, %31, %cst_17 {dimension_numbers = #tpu.dot_dimension_numbers<[1], [0], [0], [1], [0, 0, 1, 1], [], []>} : vector<8x240xbf16>, vector<240x768xbf16>, vector<8x768xf32> -> vector<8x768xf32>
    %36 = vector.extract_strided_slice %33 {offsets = [0, 0], sizes = [8, 384], strides = [1, 1]} : vector<8x768xf32> to vector<8x384xf32>
    %37 = vector.extract_strided_slice %33 {offsets = [0, 0], sizes = [8, 384], strides = [1, 1]} : vector<8x768xf32> to vector<8x384xf32>
    %38 = arith.mulf %36, %37 : vector<8x384xf32>
    %39 = vector.extract_strided_slice %33 {offsets = [0, 384], sizes = [8, 384], strides = [1, 1]} : vector<8x768xf32> to vector<8x384xf32>
    %40 = vector.extract_strided_slice %33 {offsets = [0, 384], sizes = [8, 384], strides = [1, 1]} : vector<8x768xf32> to vector<8x384xf32>
    %41 = arith.mulf %39, %40 : vector<8x384xf32>
    %42 = arith.addf %38, %41 : vector<8x384xf32>
    %43 = vector.extract_strided_slice %35 {offsets = [0, 0], sizes = [8, 384], strides = [1, 1]} : vector<8x768xf32> to vector<8x384xf32>
    %44 = vector.extract_strided_slice %35 {offsets = [0, 0], sizes = [8, 384], strides = [1, 1]} : vector<8x768xf32> to vector<8x384xf32>
    %45 = arith.mulf %43, %44 : vector<8x384xf32>
    %46 = vector.extract_strided_slice %35 {offsets = [0, 384], sizes = [8, 384], strides = [1, 1]} : vector<8x768xf32> to vector<8x384xf32>
    %47 = vector.extract_strided_slice %35 {offsets = [0, 384], sizes = [8, 384], strides = [1, 1]} : vector<8x768xf32> to vector<8x384xf32>
    %48 = arith.mulf %46, %47 : vector<8x384xf32>
    %49 = arith.addf %45, %48 : vector<8x384xf32>
    %c0_18 = arith.constant 0 : index
    %c0_19 = arith.constant 0 : index
    %50 = vector.load %arg4[%c0_18, %c0_19] : memref<8x384xf32, #tpu.memory_space<vmem>>, vector<1x384xf32>
    %cst_20 = arith.constant dense<0xFF800000> : vector<8xf32>
    %51 = vector.multi_reduction <maximumf>, %42, %cst_20 [1] : vector<8x384xf32> to vector<8xf32>
    %52 = vector.shape_cast %51 : vector<8xf32> to vector<8x1xf32>
    %53 = vector.broadcast %52 : vector<8x1xf32> to vector<8x384xf32>
    %54 = arith.cmpf oge, %42, %53 : vector<8x384xf32>
    %cst_21 = arith.constant 1.000000e+09 : f32
    %55 = vector.shape_cast %50 : vector<1x384xf32> to vector<1x384xf32>
    %56 = vector.broadcast %55 : vector<1x384xf32> to vector<8x384xf32>
    %57 = vector.broadcast %cst_21 : f32 to vector<8x384xf32>
    %58 = arith.select %54, %56, %57 : vector<8x384xi1>, vector<8x384xf32>
    %cst_22 = arith.constant dense<0x7F800000> : vector<8xf32>
    %59 = vector.multi_reduction <minimumf>, %58, %cst_22 [1] : vector<8x384xf32> to vector<8xf32>
    %60 = vector.shape_cast %59 : vector<8xf32> to vector<8x1xf32>
    %cst_23 = arith.constant 1.000000e-01 : f32
    %61 = vector.broadcast %cst_23 : f32 to vector<8x1xf32>
    %62 = arith.subf %60, %61 : vector<8x1xf32>
    %63 = vector.broadcast %50 : vector<1x384xf32> to vector<8x384xf32>
    %64 = vector.broadcast %62 : vector<8x1xf32> to vector<8x384xf32>
    %65 = arith.cmpf oge, %63, %64 : vector<8x384xf32>
    %cst_24 = arith.constant 1.000000e-01 : f32
    %66 = vector.broadcast %cst_24 : f32 to vector<8x1xf32>
    %67 = arith.addf %60, %66 : vector<8x1xf32>
    %68 = vector.broadcast %50 : vector<1x384xf32> to vector<8x384xf32>
    %69 = vector.broadcast %67 : vector<8x1xf32> to vector<8x384xf32>
    %70 = arith.cmpf ole, %68, %69 : vector<8x384xf32>
    %71 = arith.andi %65, %70 : vector<8x384xi1>
    %cst_25 = arith.constant 2.000000e+00 : f32
    %72 = vector.broadcast %cst_25 : f32 to vector<8x1xf32>
    %73 = arith.mulf %72, %60 : vector<8x1xf32>
    %cst_26 = arith.constant 2.000000e-01 : f32
    %74 = vector.broadcast %cst_26 : f32 to vector<8x1xf32>
    %75 = arith.subf %73, %74 : vector<8x1xf32>
    %76 = vector.broadcast %50 : vector<1x384xf32> to vector<8x384xf32>
    %77 = vector.broadcast %75 : vector<8x1xf32> to vector<8x384xf32>
    %78 = arith.cmpf oge, %76, %77 : vector<8x384xf32>
    %cst_27 = arith.constant 2.000000e+00 : f32
    %79 = vector.broadcast %cst_27 : f32 to vector<8x1xf32>
    %80 = arith.mulf %79, %60 : vector<8x1xf32>
    %cst_28 = arith.constant 2.000000e-01 : f32
    %81 = vector.broadcast %cst_28 : f32 to vector<8x1xf32>
    %82 = arith.addf %80, %81 : vector<8x1xf32>
    %83 = vector.broadcast %50 : vector<1x384xf32> to vector<8x384xf32>
    %84 = vector.broadcast %82 : vector<8x1xf32> to vector<8x384xf32>
    %85 = arith.cmpf ole, %83, %84 : vector<8x384xf32>
    %86 = arith.andi %78, %85 : vector<8x384xi1>
    %87 = arith.ori %71, %86 : vector<8x384xi1>
    %cst_29 = arith.constant 0.000000e+00 : f32
    %88 = vector.broadcast %cst_29 : f32 to vector<8x384xf32>
    %89 = arith.select %87, %49, %88 : vector<8x384xi1>, vector<8x384xf32>
    %cst_30 = arith.constant dense<0.000000e+00> : vector<8xf32>
    %90 = vector.multi_reduction <add>, %89, %cst_30 [1] : vector<8x384xf32> to vector<8xf32>
    %91 = vector.shape_cast %90 : vector<8xf32> to vector<8x1xf32>
    %cst_31 = arith.constant dense<0.000000e+00> : vector<8xf32>
    %92 = vector.multi_reduction <add>, %49, %cst_31 [1] : vector<8x384xf32> to vector<8xf32>
    %93 = vector.shape_cast %92 : vector<8xf32> to vector<8x1xf32>
    %94 = arith.subf %93, %91 : vector<8x1xf32>
    %95 = arith.divf %91, %94 : vector<8x1xf32>
    %96 = math.log %95 : vector<8x1xf32>
    %cst_32 = arith.constant 0.434294492 : f32
    %97 = vector.broadcast %cst_32 : f32 to vector<8x1xf32>
    %98 = arith.mulf %96, %97 : vector<8x1xf32>
    %99 = tpu.iota {dimensions = array<i32: 0>} : vector<8x1xi32>
    %c8_i32 = arith.constant 8 : i32
    %100 = arith.muli %arg0, %c8_i32 : i32
    %101 = vector.broadcast %100 : i32 to vector<8x1xi32>
    %102 = arith.addi %99, %101 : vector<8x1xi32>
    %c2_i32 = arith.constant 2 : i32
    %103 = vector.broadcast %c2_i32 : i32 to vector<8x1xi32>
    %104 = arith.cmpi slt, %102, %103 : vector<8x1xi32>
    %cst_33 = arith.constant 0.000000e+00 : f32
    %105 = vector.broadcast %cst_33 : f32 to vector<8x1xf32>
    %106 = arith.select %104, %98, %105 : vector<8x1xi1>, vector<8x1xf32>
    %cst_34 = arith.constant dense<0.000000e+00> : vector<1xf32>
    %107 = vector.multi_reduction <add>, %106, %cst_34 [0] : vector<8x1xf32> to vector<1xf32>
    %108 = vector.shape_cast %107 : vector<1xf32> to vector<1x1xf32>
    %109 = tpu.iota {dimensions = array<i32: 0>} : vector<8x128xi32>
    %cst_35 = arith.constant 0.000000e+00 : f32
    %110 = vector.broadcast %cst_35 : f32 to vector<8x128xf32>
    %c0_i32 = arith.constant 0 : i32
    %111 = vector.broadcast %c0_i32 : i32 to vector<8x128xi32>
    %112 = arith.cmpi eq, %109, %111 : vector<8x128xi32>
    %113 = vector.shape_cast %7 : vector<1x1xf32> to vector<1x1xf32>
    %114 = vector.broadcast %113 : vector<1x1xf32> to vector<8x128xf32>
    %115 = arith.select %112, %114, %110 : vector<8x128xi1>, vector<8x128xf32>
    %c1_i32 = arith.constant 1 : i32
    %116 = vector.broadcast %c1_i32 : i32 to vector<8x128xi32>
    %117 = arith.cmpi eq, %109, %116 : vector<8x128xi32>
    %118 = vector.shape_cast %11 : vector<1x1xf32> to vector<1x1xf32>
    %119 = vector.broadcast %118 : vector<1x1xf32> to vector<8x128xf32>
    %120 = arith.select %117, %119, %115 : vector<8x128xi1>, vector<8x128xf32>
    %c2_i32_36 = arith.constant 2 : i32
    %121 = vector.broadcast %c2_i32_36 : i32 to vector<8x128xi32>
    %122 = arith.cmpi eq, %109, %121 : vector<8x128xi32>
    %123 = vector.shape_cast %15 : vector<1x1xf32> to vector<1x1xf32>
    %124 = vector.broadcast %123 : vector<1x1xf32> to vector<8x128xf32>
    %125 = arith.select %122, %124, %120 : vector<8x128xi1>, vector<8x128xf32>
    %c3_i32 = arith.constant 3 : i32
    %126 = vector.broadcast %c3_i32 : i32 to vector<8x128xi32>
    %127 = arith.cmpi eq, %109, %126 : vector<8x128xi32>
    %128 = vector.shape_cast %20 : vector<1x1xf32> to vector<1x1xf32>
    %129 = vector.broadcast %128 : vector<1x1xf32> to vector<8x128xf32>
    %130 = arith.select %127, %129, %125 : vector<8x128xi1>, vector<8x128xf32>
    %c4_i32 = arith.constant 4 : i32
    %131 = vector.broadcast %c4_i32 : i32 to vector<8x128xi32>
    %132 = arith.cmpi eq, %109, %131 : vector<8x128xi32>
    %133 = vector.shape_cast %25 : vector<1x1xf32> to vector<1x1xf32>
    %134 = vector.broadcast %133 : vector<1x1xf32> to vector<8x128xf32>
    %135 = arith.select %132, %134, %130 : vector<8x128xi1>, vector<8x128xf32>
    %c5_i32 = arith.constant 5 : i32
    %136 = vector.broadcast %c5_i32 : i32 to vector<8x128xi32>
    %137 = arith.cmpi eq, %109, %136 : vector<8x128xi32>
    %138 = vector.shape_cast %30 : vector<1x1xf32> to vector<1x1xf32>
    %139 = vector.broadcast %138 : vector<1x1xf32> to vector<8x128xf32>
    %140 = arith.select %137, %139, %135 : vector<8x128xi1>, vector<8x128xf32>
    %c6_i32 = arith.constant 6 : i32
    %141 = vector.broadcast %c6_i32 : i32 to vector<8x128xi32>
    %142 = arith.cmpi eq, %109, %141 : vector<8x128xi32>
    %143 = vector.shape_cast %108 : vector<1x1xf32> to vector<1x1xf32>
    %144 = vector.broadcast %143 : vector<1x1xf32> to vector<8x128xf32>
    %145 = arith.select %142, %144, %140 : vector<8x128xi1>, vector<8x128xf32>
    %c0_37 = arith.constant 0 : index
    %c0_38 = arith.constant 0 : index
    %c0_39 = arith.constant 0 : index
    %146 = vector.load %arg5[%c0_37, %c0_38, %c0_39] : memref<1x8x128xf32, #tpu.memory_space<vmem>>, vector<1x8x128xf32>
    %147 = vector.shape_cast %146 : vector<1x8x128xf32> to vector<8x128xf32>
    %148 = vector.shape_cast %145 : vector<8x128xf32> to vector<1x8x128xf32>
    tpu.vector_store %arg5[%c0_37, %c0_38, %c0_39], %148 {strides = array<i32>} : memref<1x8x128xf32, #tpu.memory_space<vmem>>, vector<1x8x128xf32>,
    return
  }
  func.func @transform_0(%arg0: i32) -> (i32, i32) {
    %c0_i32 = arith.constant 0 : i32
    %c0_i32_0 = arith.constant 0 : i32
    return %arg0, %c0_i32 : i32, i32
  }
  func.func @transform_1(%arg0: i32) -> (i32, i32) {
    %c0_i32 = arith.constant 0 : i32
    %c0_i32_0 = arith.constant 0 : i32
    return %arg0, %c0_i32 : i32, i32
  }
  func.func @transform_2(%arg0: i32) -> (i32, i32) {
    %c0_i32 = arith.constant 0 : i32
    %c0_i32_0 = arith.constant 0 : i32
    %c0_i32_1 = arith.constant 0 : i32
    return %c0_i32, %c0_i32_0 : i32, i32
  }
  func.func @transform_3(%arg0: i32) -> (i32, i32) {
    %c0_i32 = arith.constant 0 : i32
    %c0_i32_0 = arith.constant 0 : i32
    %c0_i32_1 = arith.constant 0 : i32
    return %c0_i32, %c0_i32_0 : i32, i32
  }
  func.func @transform_4(%arg0: i32) -> (i32, i32, i32) {
    %c0_i32 = arith.constant 0 : i32
    %c0_i32_0 = arith.constant 0 : i32
    %c0_i32_1 = arith.constant 0 : i32
    return %arg0, %c0_i32, %c0_i32_0 : i32, i32, i32
  }
}

</mosaic_0001>

<llo_original>
// kernel: _combined_loss.1
$region0: #{_combined_loss.1}
  #allocation0 [shape = 'u32[]', space=smem, size = 0x4, offset = 0x4, fixed_abs, tag = 'smem constant byte address 0x4 - core index']
  #allocation1 [shape = 'u32[72,128]{1,0:T(1,128)}', space=vmem, size = 0x9000, scoped, tag = 'internal scratch']
  %s0 = inlined_call_operand.vmem [shape: f32[8,240], index: 0, kind: input, shape index: {}]
  %s1 = inlined_call_operand.vmem [shape: f32[8,240], index: 1, kind: input, shape index: {}]
  %s2 = inlined_call_operand.hbm [shape: bf16[240,768], index: 2, kind: input, shape index: {}]
  %s3 = inlined_call_operand.vmem [shape: f32[8,384], index: 3, kind: input, shape index: {}]
  %s4 = inlined_call_operand.vmem [shape: f32[1,8,128], index: 4, kind: output, shape index: {}]
  %s5 = sld [smem:[#allocation0]]
  $region30: #{_combined_loss.1} parent=0
    _
  %s7 = ssub.s32 1, %s5
  %s8 = scalar_select 0, %s7, %s5
  $region1: #{_combined_loss.1} parent=0
    #allocation2 [shape = 'u8[368640]{0}', space=vmem, size = 0x5a000, scoped, tag = 'input window, operand 2, single buffered']
    #allocation3 [shape = 's32[1]{0}', space=sflag, size = 0x4, scoped, tag = 'scoped memory for _combined_loss.1']
    %9 = vsyncpa [#allocation3], 0
    // Predicated region
    $region2: #{_combined_loss.1} parent=1 // pred_check
      _
    $region3: #{_combined_loss.1} parent=1 // pred_check_branch
      %11 = sbr.rel (0) target = $region5
    $region4: #{_combined_loss.1} parent=1 // pred_region
      _
    $region5: #{_combined_loss.1} parent=1 // pred_fallthru
      _
    // Predicated region
    $region6: #{_combined_loss.1} parent=1 // pred_check
      _
    $region7: #{_combined_loss.1} parent=1 // pred_check_branch
      %13 = sbr.rel (0) target = $region9
    $region8: #{_combined_loss.1} parent=1 // pred_region
      _
    $region9: #{_combined_loss.1} parent=1 // pred_fallthru
      _
    // Predicated region
    $region10: #{_combined_loss.1} parent=1 // pred_check
      _
    $region11: #{_combined_loss.1} parent=1 // pred_check_branch
      %15 = sbr.rel (0) target = $region13
    $region12: #{_combined_loss.1} parent=1 // pred_region
      %17 = vsyncadd [#allocation3], 0
      %s18 = sshll.u32 %s2, 4
      %s19 = int_to_ptr.hbm [resolvable:$true] %s18
      %s20 = sshll.u32 [#allocation2], 4
      %s21 = int_to_ptr.vmem [resolvable:$true] %s20
      %26 = dma.hbm_to_vmem [thread:$0]  %s19, 11520, %s21, [#allocation3], 384, 384, 24
    $region13: #{_combined_loss.1} parent=1 // pred_fallthru
      _
    // Predicated region
    $region14: #{_combined_loss.1} parent=1 // pred_check
      _
    $region15: #{_combined_loss.1} parent=1 // pred_check_branch
      %28 = sbr.rel (0) target = $region17
    $region16: #{_combined_loss.1} parent=1 // pred_region
      _
    $region17: #{_combined_loss.1} parent=1 // pred_fallthru
      _
    // Predicated region
    $region18: #{_combined_loss.1} parent=1 // pred_check
      _
    $region19: #{_combined_loss.1} parent=1 // pred_check_branch
      %30 = sbr.rel (0) target = $region21
    $region20: #{_combined_loss.1} parent=1 // pred_region
      %32 = dma.done [#allocation3], 11520
    $region21: #{_combined_loss.1} parent=1 // pred_fallthru
      _
    %v34 = vld [vmem:[%s0] sm:$0xff]
    %v35 = vld [vmem:[%s0 + $0x8] sm:$0xff]
    %v36 = vld [vmem:[%s1] sm:$0xff]
    %v37 = vld [vmem:[%s1 + $0x8] sm:$0xff]
    %v38 = vsub.f32 %v36, %v34
    %v39 = vsub.f32 %v37, %v35
    %v40 = vmul.f32 %v38, %v38
    %v41 = vmul.f32 %v39, %v39
    %vm42 = vcmask 916480
    %v43 = vsel %vm42, %v41, 0.0
    %v44 = vadd.f32 %v40, %v43
    %45 = vadd.xlane.f32.xlu0 %v44
    %v46 = vpop.xlane.xlu0 %45
    %v47 = vrot.slane %v46, 4
    %v48 = vadd.f32 %v46, %v47
    %v49 = vrot.slane %v48, 2
    %v50 = vadd.f32 %v48, %v49
    %v51 = vrot.slane %v50, 1
    %v52 = vadd.f32 %v50, %v51
    %v53 = vsel %vm42, %v37, 0.0
    %v54 = vadd.f32 %v36, %v53
    %55 = vadd.xlane.f32.xlu0 %v54
    %v56 = vpop.xlane.xlu0 %55
    %v57 = vrot.slane %v56, 4
    %v58 = vadd.f32 %v56, %v57
    %v59 = vrot.slane %v58, 2
    %v60 = vadd.f32 %v58, %v59
    %v61 = vrot.slane %v60, 1
    %v62 = vadd.f32 %v60, %v61
    %v63 = vsel %vm42, %v35, 0.0
    %v64 = vadd.f32 %v34, %v63
    %65 = vadd.xlane.f32.xlu0 %v64
    %v66 = vpop.xlane.xlu0 %65
    %v67 = vrot.slane %v66, 4
    %v68 = vadd.f32 %v66, %v67
    %v69 = vrot.slane %v68, 2
    %v70 = vadd.f32 %v68, %v69
    %v71 = vrot.slane %v70, 1
    %v72 = vadd.f32 %v70, %v71
    %v73 = vmul.f32 %v36, %v34
    %v74 = vmul.f32 %v37, %v35
    %v75 = vsel %vm42, %v74, 0.0
    %v76 = vadd.f32 %v73, %v75
    %77 = vadd.xlane.f32.xlu0 %v76
    %v78 = vpop.xlane.xlu0 %77
    %v79 = vrot.slane %v78, 4
    %v80 = vadd.f32 %v78, %v79
    %v81 = vrot.slane %v80, 2
    %v82 = vadd.f32 %v80, %v81
    %v83 = vrot.slane %v82, 1
    %v84 = vadd.f32 %v82, %v83
    %v85 = vmul.f32 %v36, %v36
    %v86 = vmul.f32 %v37, %v37
    %v87 = vsel %vm42, %v86, 0.0
    %v88 = vadd.f32 %v85, %v87
    %89 = vadd.xlane.f32.xlu0 %v88
    %v90 = vpop.xlane.xlu0 %89
    %v91 = vrot.slane %v90, 4
    %v92 = vadd.f32 %v90, %v91
    %v93 = vrot.slane %v92, 2
    %v94 = vadd.f32 %v92, %v93
    %v95 = vrot.slane %v94, 1
    %v96 = vadd.f32 %v94, %v95
    %v97 = vmul.f32 %v34, %v34
    %v98 = vmul.f32 %v35, %v35
    %v99 = vsel %vm42, %v98, 0.0
    %v100 = vadd.f32 %v97, %v99
    %101 = vadd.xlane.f32.xlu0 %v100
    %v102 = vpop.xlane.xlu0 %101
    %v103 = vrot.slane %v102, 4
    %v104 = vadd.f32 %v102, %v103
    %v105 = vrot.slane %v104, 2
    %v106 = vadd.f32 %v104, %v105
    %v107 = vrot.slane %v106, 1
    %v108 = vadd.f32 %v106, %v107
    %v109 = vld [vmem:[#allocation2] sm:$0xff]
    %v110 = vld [vmem:[#allocation2 + $0x8] sm:$0xff]
    %v111 = vld [vmem:[#allocation2 + $0x10] sm:$0xff]
    %v112 = vld [vmem:[#allocation2 + $0x18] sm:$0xff]
    %v113 = vld [vmem:[#allocation2 + $0x20] sm:$0xff]
    %v114 = vld [vmem:[#allocation2 + $0x28] sm:$0xff]
    %v115 = vld [vmem:[#allocation2 + $0x30] sm:$0xff]
    %v116 = vld [vmem:[#allocation2 + $0x38] sm:$0xff]
    %v117 = vld [vmem:[#allocation2 + $0x40] sm:$0xff]
    %v118 = vld [vmem:[#allocation2 + $0x48] sm:$0xff]
    %v119 = vld [vmem:[#allocation2 + $0x50] sm:$0xff]
    %v120 = vld [vmem:[#allocation2 + $0x58] sm:$0xff]
    %v121 = vld [vmem:[#allocation2 + $0x60] sm:$0xff]
    %v122 = vld [vmem:[#allocation2 + $0x68] sm:$0xff]
    %v123 = vld [vmem:[#allocation2 + $0x70] sm:$0xff]
    %v124 = vld [vmem:[#allocation2 + $0x78] sm:$0xff]
    %v125 = vld [vmem:[#allocation2 + $0x80] sm:$0xff]
    %v126 = vld [vmem:[#allocation2 + $0x88] sm:$0xff]
    %v127 = vld [vmem:[#allocation2 + $0x90] sm:$0xff]
    %v128 = vld [vmem:[#allocation2 + $0x98] sm:$0xff]
    %v129 = vld [vmem:[#allocation2 + $0xa0] sm:$0xff]
    %v130 = vld [vmem:[#allocation2 + $0xa8] sm:$0xff]
    %v131 = vld [vmem:[#allocation2 + $0xb0] sm:$0xff]
    %v132 = vld [vmem:[#allocation2 + $0xb8] sm:$0xff]
    %v133 = vld [vmem:[#allocation2 + $0xc0] sm:$0xff]
    %v134 = vld [vmem:[#allocation2 + $0xc8] sm:$0xff]
    %v135 = vld [vmem:[#allocation2 + $0xd0] sm:$0xff]
    %v136 = vld [vmem:[#allocation2 + $0xd8] sm:$0xff]
    %v137 = vld [vmem:[#allocation2 + $0xe0] sm:$0xff]
    %v138 = vld [vmem:[#allocation2 + $0xe8] sm:$0xff]
    %v139 = vld [vmem:[#allocation2 + $0xf0] sm:$0xff]
    %v140 = vld [vmem:[#allocation2 + $0xf8] sm:$0xff]
    %v141 = vld [vmem:[#allocation2 + $0x100] sm:$0xff]
    %v142 = vld [vmem:[#allocation2 + $0x108] sm:$0xff]
    %v143 = vld [vmem:[#allocation2 + $0x110] sm:$0xff]
    %v144 = vld [vmem:[#allocation2 + $0x118] sm:$0xff]
    %v145 = vld [vmem:[#allocation2 + $0x120] sm:$0xff]
    %v146 = vld [vmem:[#allocation2 + $0x128] sm:$0xff]
    %v147 = vld [vmem:[#allocation2 + $0x130] sm:$0xff]
    %v148 = vld [vmem:[#allocation2 + $0x138] sm:$0xff]
    %v149 = vld [vmem:[#allocation2 + $0x140] sm:$0xff]
    %v150 = vld [vmem:[#allocation2 + $0x148] sm:$0xff]
    %v151 = vld [vmem:[#allocation2 + $0x150] sm:$0xff]
    %v152 = vld [vmem:[#allocation2 + $0x158] sm:$0xff]
    %v153 = vld [vmem:[#allocation2 + $0x160] sm:$0xff]
    %v154 = vld [vmem:[#allocation2 + $0x168] sm:$0xff]
    %v155 = vld [vmem:[#allocation2 + $0x170] sm:$0xff]
    %v156 = vld [vmem:[#allocation2 + $0x178] sm:$0xff]
    %v157 = vld [vmem:[#allocation2 + $0x180] sm:$0xff]
    %v158 = vld [vmem:[#allocation2 + $0x188] sm:$0xff]
    %v159 = vld [vmem:[#allocation2 + $0x190] sm:$0xff]
    %v160 = vld [vmem:[#allocation2 + $0x198] sm:$0xff]
    %v161 = vld [vmem:[#allocation2 + $0x1a0] sm:$0xff]
    %v162 = vld [vmem:[#allocation2 + $0x1a8] sm:$0xff]
    %v163 = vld [vmem:[#allocation2 + $0x1b0] sm:$0xff]
    %v164 = vld [vmem:[#allocation2 + $0x1b8] sm:$0xff]
    %v165 = vld [vmem:[#allocation2 + $0x1c0] sm:$0xff]
    %v166 = vld [vmem:[#allocation2 + $0x1c8] sm:$0xff]
    %v167 = vld [vmem:[#allocation2 + $0x1d0] sm:$0xff]
    %v168 = vld [vmem:[#allocation2 + $0x1d8] sm:$0xff]
    %v169 = vld [vmem:[#allocation2 + $0x1e0] sm:$0xff]
    %v170 = vld [vmem:[#allocation2 + $0x1e8] sm:$0xff]
    %v171 = vld [vmem:[#allocation2 + $0x1f0] sm:$0xff]
    %v172 = vld [vmem:[#allocation2 + $0x1f8] sm:$0xff]
    %v173 = vld [vmem:[#allocation2 + $0x200] sm:$0xff]
    %v174 = vld [vmem:[#allocation2 + $0x208] sm:$0xff]
    %v175 = vld [vmem:[#allocation2 + $0x210] sm:$0xff]
    %v176 = vld [vmem:[#allocation2 + $0x218] sm:$0xff]
    %v177 = vld [vmem:[#allocation2 + $0x220] sm:$0xff]
    %v178 = vld [vmem:[#allocation2 + $0x228] sm:$0xff]
    %v179 = vld [vmem:[#allocation2 + $0x230] sm:$0xff]
    %v180 = vld [vmem:[#allocation2 + $0x238] sm:$0xff]
    %v181 = vld [vmem:[#allocation2 + $0x240] sm:$0xff]
    %v182 = vld [vmem:[#allocation2 + $0x248] sm:$0xff]
    %v183 = vld [vmem:[#allocation2 + $0x250] sm:$0xff]
    %v184 = vld [vmem:[#allocation2 + $0x258] sm:$0xff]
    %v185 = vld [vmem:[#allocation2 + $0x260] sm:$0xff]
    %v186 = vld [vmem:[#allocation2 + $0x268] sm:$0xff]
    %v187 = vld [vmem:[#allocation2 + $0x270] sm:$0xff]
    %v188 = vld [vmem:[#allocation2 + $0x278] sm:$0xff]
    %v189 = vld [vmem:[#allocation2 + $0x280] sm:$0xff]
    %v190 = vld [vmem:[#allocation2 + $0x288] sm:$0xff]
    %v191 = vld [vmem:[#allocation2 + $0x290] sm:$0xff]
    %v192 = vld [vmem:[#allocation2 + $0x298] sm:$0xff]
    %v193 = vld [vmem:[#allocation2 + $0x2a0] sm:$0xff]
    %v194 = vld [vmem:[#allocation2 + $0x2a8] sm:$0xff]
    %v195 = vld [vmem:[#allocation2 + $0x2b0] sm:$0xff]
    %v196 = vld [vmem:[#allocation2 + $0x2b8] sm:$0xff]
    %v197 = vld [vmem:[#allocation2 + $0x2c0] sm:$0xff]
    %v198 = vld [vmem:[#allocation2 + $0x2c8] sm:$0xff]
    %v199 = vpack.c.bf16 %v34, %v34
    %v200 = vpack.c.bf16 %v35, %v35
    %v291 = vunpack.c.l.b16 %v109
    %v292 = vunpack.c.h.b16 %v109
    %v293 = vunpack.c.l.b16 %v110
    %v294 = vunpack.c.h.b16 %v110
    %v295 = vunpack.c.l.b16 %v111
    %v296 = vunpack.c.h.b16 %v111
    %v297 = vunpack.c.l.b16 %v112
    %v298 = vunpack.c.h.b16 %v112
    %v299 = vunpack.c.l.b16 %v113
    %v300 = vunpack.c.h.b16 %v113
    %v301 = vunpack.c.l.b16 %v114
    %v302 = vunpack.c.h.b16 %v114
    %v303 = vunpack.c.l.b16 %v115
    %v304 = vunpack.c.h.b16 %v115
    %v305 = vunpack.c.l.b16 %v116
    %v306 = vunpack.c.h.b16 %v116
    %v307 = vunpack.c.l.b16 %v117
    %v308 = vunpack.c.h.b16 %v117
    %v309 = vunpack.c.l.b16 %v118
    %v310 = vunpack.c.h.b16 %v118
    %v311 = vunpack.c.l.b16 %v119
    %v312 = vunpack.c.h.b16 %v119
    %v313 = vunpack.c.l.b16 %v120
    %v314 = vunpack.c.h.b16 %v120
    %v315 = vunpack.c.l.b16 %v121
    %v316 = vunpack.c.h.b16 %v121
    %v317 = vunpack.c.l.b16 %v122
    %v318 = vunpack.c.h.b16 %v122
    %v319 = vunpack.c.l.b16 %v123
    %v320 = vunpack.c.h.b16 %v123
    %v321 = vunpack.c.l.b16 %v124
    %v322 = vunpack.c.h.b16 %v124
    %v323 = vunpack.c.l.b16 %v125
    %v324 = vunpack.c.h.b16 %v125
    %v325 = vunpack.c.l.b16 %v126
    %v326 = vunpack.c.h.b16 %v126
    %v327 = vunpack.c.l.b16 %v127
    %v328 = vunpack.c.h.b16 %v127
    %v329 = vunpack.c.l.b16 %v128
    %v330 = vunpack.c.h.b16 %v128
    %v331 = vunpack.c.l.b16 %v129
    %v332 = vunpack.c.h.b16 %v129
    %v333 = vunpack.c.l.b16 %v130
    %v334 = vunpack.c.h.b16 %v130
    %v335 = vunpack.c.l.b16 %v131
    %v336 = vunpack.c.h.b16 %v131
    %v337 = vunpack.c.l.b16 %v132
    %v338 = vunpack.c.h.b16 %v132
    %v339 = vunpack.c.l.b16 %v133
    %v340 = vunpack.c.h.b16 %v133
    %v341 = vunpack.c.l.b16 %v134
    %v342 = vunpack.c.h.b16 %v134
    %v343 = vunpack.c.l.b16 %v135
    %v344 = vunpack.c.h.b16 %v135
    %v345 = vunpack.c.l.b16 %v136
    %v346 = vunpack.c.h.b16 %v136
    %v347 = vunpack.c.l.b16 %v137
    %v348 = vunpack.c.h.b16 %v137
    %v349 = vunpack.c.l.b16 %v138
    %v350 = vunpack.c.h.b16 %v138
    %v351 = vunpack.c.l.b16 %v139
    %v352 = vunpack.c.h.b16 %v139
    %v353 = vunpack.c.l.b16 %v140
    %v354 = vunpack.c.h.b16 %v140
    %v355 = vunpack.c.l.b16 %v141
    %v356 = vunpack.c.h.b16 %v141
    %v357 = vunpack.c.l.b16 %v142
    %v358 = vunpack.c.h.b16 %v142
    %v359 = vunpack.c.l.b16 %v143
    %v360 = vunpack.c.h.b16 %v143
    %v361 = vunpack.c.l.b16 %v144
    %v362 = vunpack.c.h.b16 %v144
    %v363 = vunpack.c.l.b16 %v145
    %v364 = vunpack.c.h.b16 %v145
    %v365 = vunpack.c.l.b16 %v146
    %v366 = vunpack.c.h.b16 %v146
    %v367 = vunpack.c.l.b16 %v147
    %v368 = vunpack.c.h.b16 %v147
    %v369 = vunpack.c.l.b16 %v148
    %v370 = vunpack.c.h.b16 %v148
    %v371 = vunpack.c.l.b16 %v149
    %v372 = vunpack.c.h.b16 %v149
    %v373 = vunpack.c.l.b16 %v150
    %v374 = vunpack.c.h.b16 %v150
    %v375 = vunpack.c.l.b16 %v151
    %v376 = vunpack.c.h.b16 %v151
    %v377 = vunpack.c.l.b16 %v152
    %v378 = vunpack.c.h.b16 %v152
    %v379 = vunpack.c.l.b16 %v153
    %v380 = vunpack.c.h.b16 %v153
    %v381 = vunpack.c.l.b16 %v154
    %v382 = vunpack.c.h.b16 %v154
    %v383 = vunpack.c.l.b16 %v155
    %v384 = vunpack.c.h.b16 %v155
    %v385 = vunpack.c.l.b16 %v156
    %v386 = vunpack.c.h.b16 %v156
    %v387 = vunpack.c.l.b16 %v157
    %v388 = vunpack.c.h.b16 %v157
    %v389 = vunpack.c.l.b16 %v158
    %v390 = vunpack.c.h.b16 %v158
    %v391 = vunpack.c.l.b16 %v159
    %v392 = vunpack.c.h.b16 %v159
    %v393 = vunpack.c.l.b16 %v160
    %v394 = vunpack.c.h.b16 %v160
    %v395 = vunpack.c.l.b16 %v161
    %v396 = vunpack.c.h.b16 %v161
    %v397 = vunpack.c.l.b16 %v162
    %v398 = vunpack.c.h.b16 %v162
    %v399 = vunpack.c.l.b16 %v163
    %v400 = vunpack.c.h.b16 %v163
    %v401 = vunpack.c.l.b16 %v164
    %v402 = vunpack.c.h.b16 %v164
    %v403 = vunpack.c.l.b16 %v165
    %v404 = vunpack.c.h.b16 %v165
    %v405 = vunpack.c.l.b16 %v166
    %v406 = vunpack.c.h.b16 %v166
    %v407 = vunpack.c.l.b16 %v167
    %v408 = vunpack.c.h.b16 %v167
    %v409 = vunpack.c.l.b16 %v168
    %v410 = vunpack.c.h.b16 %v168
    %v411 = vunpack.c.l.b16 %v169
    %v412 = vunpack.c.h.b16 %v169
    %v413 = vunpack.c.l.b16 %v170
    %v414 = vunpack.c.h.b16 %v170
    %v415 = vunpack.c.l.b16 %v171
    %v416 = vunpack.c.h.b16 %v171
    %v417 = vunpack.c.l.b16 %v172
    %v418 = vunpack.c.h.b16 %v172
    %v419 = vunpack.c.l.b16 %v173
    %v420 = vunpack.c.h.b16 %v173
    %v421 = vunpack.c.l.b16 %v174
    %v422 = vunpack.c.h.b16 %v174
    %v423 = vunpack.c.l.b16 %v175
    %v424 = vunpack.c.h.b16 %v175
    %v425 = vunpack.c.l.b16 %v176
    %v426 = vunpack.c.h.b16 %v176
    %v427 = vunpack.c.l.b16 %v177
    %v428 = vunpack.c.h.b16 %v177
    %v429 = vunpack.c.l.b16 %v178
    %v430 = vunpack.c.h.b16 %v178
    %v431 = vunpack.c.l.b16 %v179
    %v432 = vunpack.c.h.b16 %v179
    %v433 = vunpack.c.l.b16 %v180
    %v434 = vunpack.c.h.b16 %v180
    %v435 = vunpack.c.l.b16 %v181
    %v436 = vunpack.c.h.b16 %v181
    %v437 = vunpack.c.l.b16 %v182
    %v438 = vunpack.c.h.b16 %v182
    %v439 = vunpack.c.l.b16 %v183
    %v440 = vunpack.c.h.b16 %v183
    %v441 = vunpack.c.l.b16 %v184
    %v442 = vunpack.c.h.b16 %v184
    %v443 = vunpack.c.l.b16 %v185
    %v444 = vunpack.c.h.b16 %v185
    %v445 = vunpack.c.l.b16 %v186
    %v446 = vunpack.c.h.b16 %v186
    %v447 = vunpack.c.l.b16 %v187
    %v448 = vunpack.c.h.b16 %v187
    %v449 = vunpack.c.l.b16 %v188
    %v450 = vunpack.c.h.b16 %v188
    %v451 = vunpack.c.l.b16 %v189
    %v452 = vunpack.c.h.b16 %v189
    %v453 = vunpack.c.l.b16 %v190
    %v454 = vunpack.c.h.b16 %v190
    %v455 = vunpack.c.l.b16 %v191
    %v456 = vunpack.c.h.b16 %v191
    %v457 = vunpack.c.l.b16 %v192
    %v458 = vunpack.c.h.b16 %v192
    %v459 = vunpack.c.l.b16 %v193
    %v460 = vunpack.c.h.b16 %v193
    %v461 = vunpack.c.l.b16 %v194
    %v462 = vunpack.c.h.b16 %v194
    %v463 = vunpack.c.l.b16 %v195
    %v464 = vunpack.c.h.b16 %v195
    %v465 = vunpack.c.l.b16 %v196
    %v466 = vunpack.c.h.b16 %v196
    %v467 = vunpack.c.l.b16 %v197
    %v468 = vunpack.c.h.b16 %v197
    %v469 = vunpack.c.l.b16 %v198
    %v470 = vunpack.c.h.b16 %v198
    %v471 = vpack.c.b16 %v297, %v291
    %v472 = vpack.c.b16 %v298, %v292
    %v473 = vpack.c.b16 %v299, %v293
    %v474 = vpack.c.b16 %v300, %v294
    %v475 = vpack.c.b16 %v301, %v295
    %v476 = vpack.c.b16 %v302, %v296
    %v477 = vpack.c.b16 %v309, %v303
    %v478 = vpack.c.b16 %v310, %v304
    %v479 = vpack.c.b16 %v311, %v305
    %v480 = vpack.c.b16 %v312, %v306
    %v481 = vpack.c.b16 %v313, %v307
    %v482 = vpack.c.b16 %v314, %v308
    %v483 = vpack.c.b16 %v321, %v315
    %v484 = vpack.c.b16 %v322, %v316
    %v485 = vpack.c.b16 %v323, %v317
    %v486 = vpack.c.b16 %v324, %v318
    %v487 = vpack.c.b16 %v325, %v319
    %v488 = vpack.c.b16 %v326, %v320
    %v489 = vpack.c.b16 %v333, %v327
    %v490 = vpack.c.b16 %v334, %v328
    %v491 = vpack.c.b16 %v335, %v329
    %v492 = vpack.c.b16 %v336, %v330
    %v493 = vpack.c.b16 %v337, %v331
    %v494 = vpack.c.b16 %v338, %v332
    %v495 = vpack.c.b16 %v345, %v339
    %v496 = vpack.c.b16 %v346, %v340
    %v497 = vpack.c.b16 %v347, %v341
    %v498 = vpack.c.b16 %v348, %v342
    %v499 = vpack.c.b16 %v349, %v343
    %v500 = vpack.c.b16 %v350, %v344
    %v501 = vpack.c.b16 %v357, %v351
    %v502 = vpack.c.b16 %v358, %v352
    %v503 = vpack.c.b16 %v359, %v353
    %v504 = vpack.c.b16 %v360, %v354
    %v505 = vpack.c.b16 %v361, %v355
    %v506 = vpack.c.b16 %v362, %v356
    %v507 = vpack.c.b16 %v369, %v363
    %v508 = vpack.c.b16 %v370, %v364
    %v509 = vpack.c.b16 %v371, %v365
    %v510 = vpack.c.b16 %v372, %v366
    %v511 = vpack.c.b16 %v373, %v367
    %v512 = vpack.c.b16 %v374, %v368
    %v513 = vpack.c.b16 %v381, %v375
    %v514 = vpack.c.b16 %v382, %v376
    %v515 = vpack.c.b16 %v383, %v377
    %v516 = vpack.c.b16 %v384, %v378
    %v517 = vpack.c.b16 %v385, %v379
    %v518 = vpack.c.b16 %v386, %v380
    %v519 = vpack.c.b16 %v393, %v387
    %v520 = vpack.c.b16 %v394, %v388
    %v521 = vpack.c.b16 %v395, %v389
    %v522 = vpack.c.b16 %v396, %v390
    %v523 = vpack.c.b16 %v397, %v391
    %v524 = vpack.c.b16 %v398, %v392
    %v525 = vpack.c.b16 %v405, %v399
    %v526 = vpack.c.b16 %v406, %v400
    %v527 = vpack.c.b16 %v407, %v401
    %v528 = vpack.c.b16 %v408, %v402
    %v529 = vpack.c.b16 %v409, %v403
    %v530 = vpack.c.b16 %v410, %v404
    %v531 = vpack.c.b16 %v417, %v411
    %v532 = vpack.c.b16 %v418, %v412
    %v533 = vpack.c.b16 %v419, %v413
    %v534 = vpack.c.b16 %v420, %v414
    %v535 = vpack.c.b16 %v421, %v415
    %v536 = vpack.c.b16 %v422, %v416
    %v537 = vpack.c.b16 %v429, %v423
    %v538 = vpack.c.b16 %v430, %v424
    %v539 = vpack.c.b16 %v431, %v425
    %v540 = vpack.c.b16 %v432, %v426
    %v541 = vpack.c.b16 %v433, %v427
    %v542 = vpack.c.b16 %v434, %v428
    %v543 = vpack.c.b16 %v441, %v435
    %v544 = vpack.c.b16 %v442, %v436
    %v545 = vpack.c.b16 %v443, %v437
    %v546 = vpack.c.b16 %v444, %v438
    %v547 = vpack.c.b16 %v445, %v439
    %v548 = vpack.c.b16 %v446, %v440
    %v549 = vpack.c.b16 %v453, %v447
    %v550 = vpack.c.b16 %v454, %v448
    %v551 = vpack.c.b16 %v455, %v449
    %v552 = vpack.c.b16 %v456, %v450
    %v553 = vpack.c.b16 %v457, %v451
    %v554 = vpack.c.b16 %v458, %v452
    %v555 = vpack.c.b16 %v465, %v459
    %v556 = vpack.c.b16 %v466, %v460
    %v557 = vpack.c.b16 %v467, %v461
    %v558 = vpack.c.b16 %v468, %v462
    %v559 = vpack.c.b16 %v469, %v463
    %v560 = vpack.c.b16 %v470, %v464
    %v652 = vsel %vm42, %v200, 0
    %654 = vmatpush.bf16.msra.mxu0 %v513
    %655 = vmatpush.bf16.msra.mxu0 %v507
    %656 = vmatpush.bf16.msra.mxu0 %v501
    %657 = vmatpush.bf16.msra.mxu0 %v495
    %658 = vmatpush.bf16.msra.mxu0 %v489
    %659 = vmatpush.bf16.msra.mxu0 %v483
    %660 = vmatpush.bf16.msra.mxu0 %v477
    %661 = vmatpush.bf16.msra.mxu0 %v471
    %662 = vmatmul.bf16.gmra.mxu0 %v199
    %v663 = vpop.f32.mrf.mxu0
    %v664 = vadd.f32 0.0, %v663
    %v665 = vpop.f32.mrf.mxu0
    %666 = vdwg.mxu0
    %667 = vmatpush.bf16.msra.mxu0 0
    %668 = vmatpush.bf16.msra.mxu0 %v555
    %669 = vmatpush.bf16.msra.mxu0 %v549
    %670 = vmatpush.bf16.msra.mxu0 %v543
    %671 = vmatpush.bf16.msra.mxu0 %v537
    %672 = vmatpush.bf16.msra.mxu0 %v531
    %673 = vmatpush.bf16.msra.mxu0 %v525
    %674 = vmatpush.bf16.msra.mxu0 %v519
    %675 = vmatmul.bf16.gmra.mxu0 %v652
    %v676 = vpop.f32.mrf.mxu0
    %v677 = vadd.f32 %v664, %v676
    %v678 = vpop.f32.mrf.mxu0
    %679 = vdwg.mxu0
    %680 = vmatpush.bf16.msra.mxu0 %v514
    %681 = vmatpush.bf16.msra.mxu0 %v508
    %682 = vmatpush.bf16.msra.mxu0 %v502
    %683 = vmatpush.bf16.msra.mxu0 %v496
    %684 = vmatpush.bf16.msra.mxu0 %v490
    %685 = vmatpush.bf16.msra.mxu0 %v484
    %686 = vmatpush.bf16.msra.mxu0 %v478
    %687 = vmatpush.bf16.msra.mxu0 %v472
    %688 = vmatmul.bf16.gmra.mxu0 %v199
    %v689 = vpop.f32.mrf.mxu0
    %v690 = vadd.f32 0.0, %v689
    %v691 = vpop.f32.mrf.mxu0
    %692 = vdwg.mxu0
    %693 = vmatpush.bf16.msra.mxu0 0
    %694 = vmatpush.bf16.msra.mxu0 %v556
    %695 = vmatpush.bf16.msra.mxu0 %v550
    %696 = vmatpush.bf16.msra.mxu0 %v544
    %697 = vmatpush.bf16.msra.mxu0 %v538
    %698 = vmatpush.bf16.msra.mxu0 %v532
    %699 = vmatpush.bf16.msra.mxu0 %v526
    %700 = vmatpush.bf16.msra.mxu0 %v520
    %701 = vmatmul.bf16.gmra.mxu0 %v652
    %v702 = vpop.f32.mrf.mxu0
    %v703 = vadd.f32 %v690, %v702
    %v704 = vpop.f32.mrf.mxu0
    %705 = vdwg.mxu0
    %706 = vmatpush.bf16.msra.mxu0 %v515
    %707 = vmatpush.bf16.msra.mxu0 %v509
    %708 = vmatpush.bf16.msra.mxu0 %v503
    %709 = vmatpush.bf16.msra.mxu0 %v497
    %710 = vmatpush.bf16.msra.mxu0 %v491
    %711 = vmatpush.bf16.msra.mxu0 %v485
    %712 = vmatpush.bf16.msra.mxu0 %v479
    %713 = vmatpush.bf16.msra.mxu0 %v473
    %714 = vmatmul.bf16.gmra.mxu0 %v199
    %v715 = vpop.f32.mrf.mxu0
    %v716 = vadd.f32 0.0, %v715
    %v717 = vpop.f32.mrf.mxu0
    %718 = vdwg.mxu0
    %719 = vmatpush.bf16.msra.mxu0 0
    %720 = vmatpush.bf16.msra.mxu0 %v557
    %721 = vmatpush.bf16.msra.mxu0 %v551
    %722 = vmatpush.bf16.msra.mxu0 %v545
    %723 = vmatpush.bf16.msra.mxu0 %v539
    %724 = vmatpush.bf16.msra.mxu0 %v533
    %725 = vmatpush.bf16.msra.mxu0 %v527
    %726 = vmatpush.bf16.msra.mxu0 %v521
    %727 = vmatmul.bf16.gmra.mxu0 %v652
    %v728 = vpop.f32.mrf.mxu0
    %v729 = vadd.f32 %v716, %v728
    %v730 = vpop.f32.mrf.mxu0
    %731 = vdwg.mxu0
    %732 = vmatpush.bf16.msra.mxu0 %v516
    %733 = vmatpush.bf16.msra.mxu0 %v510
    %734 = vmatpush.bf16.msra.mxu0 %v504
    %735 = vmatpush.bf16.msra.mxu0 %v498
    %736 = vmatpush.bf16.msra.mxu0 %v492
    %737 = vmatpush.bf16.msra.mxu0 %v486
    %738 = vmatpush.bf16.msra.mxu0 %v480
    %739 = vmatpush.bf16.msra.mxu0 %v474
    %740 = vmatmul.bf16.gmra.mxu0 %v199
    %v741 = vpop.f32.mrf.mxu0
    %v742 = vadd.f32 0.0, %v741
    %v743 = vpop.f32.mrf.mxu0
    %744 = vdwg.mxu0
    %745 = vmatpush.bf16.msra.mxu0 0
    %746 = vmatpush.bf16.msra.mxu0 %v558
    %747 = vmatpush.bf16.msra.mxu0 %v552
    %748 = vmatpush.bf16.msra.mxu0 %v546
    %749 = vmatpush.bf16.msra.mxu0 %v540
    %750 = vmatpush.bf16.msra.mxu0 %v534
    %751 = vmatpush.bf16.msra.mxu0 %v528
    %752 = vmatpush.bf16.msra.mxu0 %v522
    %753 = vmatmul.bf16.gmra.mxu0 %v652
    %v754 = vpop.f32.mrf.mxu0
    %v755 = vadd.f32 %v742, %v754
    %v756 = vpop.f32.mrf.mxu0
    %757 = vdwg.mxu0
    %758 = vmatpush.bf16.msra.mxu0 %v517
    %759 = vmatpush.bf16.msra.mxu0 %v511
    %760 = vmatpush.bf16.msra.mxu0 %v505
    %761 = vmatpush.bf16.msra.mxu0 %v499
    %762 = vmatpush.bf16.msra.mxu0 %v493
    %763 = vmatpush.bf16.msra.mxu0 %v487
    %764 = vmatpush.bf16.msra.mxu0 %v481
    %765 = vmatpush.bf16.msra.mxu0 %v475
    %766 = vmatmul.bf16.gmra.mxu0 %v199
    %v767 = vpop.f32.mrf.mxu0
    %v768 = vadd.f32 0.0, %v767
    %v769 = vpop.f32.mrf.mxu0
    %770 = vdwg.mxu0
    %771 = vmatpush.bf16.msra.mxu0 0
    %772 = vmatpush.bf16.msra.mxu0 %v559
    %773 = vmatpush.bf16.msra.mxu0 %v553
    %774 = vmatpush.bf16.msra.mxu0 %v547
    %775 = vmatpush.bf16.msra.mxu0 %v541
    %776 = vmatpush.bf16.msra.mxu0 %v535
    %777 = vmatpush.bf16.msra.mxu0 %v529
    %778 = vmatpush.bf16.msra.mxu0 %v523
    %779 = vmatmul.bf16.gmra.mxu0 %v652
    %v780 = vpop.f32.mrf.mxu0
    %v781 = vadd.f32 %v768, %v780
    %v782 = vpop.f32.mrf.mxu0
    %783 = vdwg.mxu0
    %784 = vmatpush.bf16.msra.mxu0 %v518
    %785 = vmatpush.bf16.msra.mxu0 %v512
    %786 = vmatpush.bf16.msra.mxu0 %v506
    %787 = vmatpush.bf16.msra.mxu0 %v500
    %788 = vmatpush.bf16.msra.mxu0 %v494
    %789 = vmatpush.bf16.msra.mxu0 %v488
    %790 = vmatpush.bf16.msra.mxu0 %v482
    %791 = vmatpush.bf16.msra.mxu0 %v476
    %792 = vmatmul.bf16.gmra.mxu0 %v199
    %v793 = vpop.f32.mrf.mxu0
    %v794 = vadd.f32 0.0, %v793
    %v795 = vpop.f32.mrf.mxu0
    %796 = vdwg.mxu0
    %797 = vmatpush.bf16.msra.mxu0 0
    %798 = vmatpush.bf16.msra.mxu0 %v560
    %799 = vmatpush.bf16.msra.mxu0 %v554
    %800 = vmatpush.bf16.msra.mxu0 %v548
    %801 = vmatpush.bf16.msra.mxu0 %v542
    %802 = vmatpush.bf16.msra.mxu0 %v536
    %803 = vmatpush.bf16.msra.mxu0 %v530
    %804 = vmatpush.bf16.msra.mxu0 %v524
    %805 = vmatmul.bf16.gmra.mxu0 %v652
    %v806 = vpop.f32.mrf.mxu0
    %v807 = vadd.f32 %v794, %v806
    %v808 = vpop.f32.mrf.mxu0
    %809 = vdwg.mxu0
    %v810 = vpack.c.bf16 %v36, %v36
    %v811 = vpack.c.bf16 %v37, %v37
    %v813 = vsel %vm42, %v811, 0
    %815 = vmatpush.bf16.msra.mxu0 %v513
    %816 = vmatpush.bf16.msra.mxu0 %v507
    %817 = vmatpush.bf16.msra.mxu0 %v501
    %818 = vmatpush.bf16.msra.mxu0 %v495
    %819 = vmatpush.bf16.msra.mxu0 %v489
    %820 = vmatpush.bf16.msra.mxu0 %v483
    %821 = vmatpush.bf16.msra.mxu0 %v477
    %822 = vmatpush.bf16.msra.mxu0 %v471
    %823 = vmatmul.bf16.gmra.mxu0 %v810
    %v824 = vpop.f32.mrf.mxu0
    %v825 = vadd.f32 0.0, %v824
    %v826 = vpop.f32.mrf.mxu0
    %827 = vdwg.mxu0
    %828 = vmatpush.bf16.msra.mxu0 0
    %829 = vmatpush.bf16.msra.mxu0 %v555
    %830 = vmatpush.bf16.msra.mxu0 %v549
    %831 = vmatpush.bf16.msra.mxu0 %v543
    %832 = vmatpush.bf16.msra.mxu0 %v537
    %833 = vmatpush.bf16.msra.mxu0 %v531
    %834 = vmatpush.bf16.msra.mxu0 %v525
    %835 = vmatpush.bf16.msra.mxu0 %v519
    %836 = vmatmul.bf16.gmra.mxu0 %v813
    %v837 = vpop.f32.mrf.mxu0
    %v838 = vadd.f32 %v825, %v837
    %v839 = vpop.f32.mrf.mxu0
    %840 = vdwg.mxu0
    %841 = vmatpush.bf16.msra.mxu0 %v514
    %842 = vmatpush.bf16.msra.mxu0 %v508
    %843 = vmatpush.bf16.msra.mxu0 %v502
    %844 = vmatpush.bf16.msra.mxu0 %v496
    %845 = vmatpush.bf16.msra.mxu0 %v490
    %846 = vmatpush.bf16.msra.mxu0 %v484
    %847 = vmatpush.bf16.msra.mxu0 %v478
    %848 = vmatpush.bf16.msra.mxu0 %v472
    %849 = vmatmul.bf16.gmra.mxu0 %v810
    %v850 = vpop.f32.mrf.mxu0
    %v851 = vadd.f32 0.0, %v850
    %v852 = vpop.f32.mrf.mxu0
    %853 = vdwg.mxu0
    %854 = vmatpush.bf16.msra.mxu0 0
    %855 = vmatpush.bf16.msra.mxu0 %v556
    %856 = vmatpush.bf16.msra.mxu0 %v550
    %857 = vmatpush.bf16.msra.mxu0 %v544
    %858 = vmatpush.bf16.msra.mxu0 %v538
    %859 = vmatpush.bf16.msra.mxu0 %v532
    %860 = vmatpush.bf16.msra.mxu0 %v526
    %861 = vmatpush.bf16.msra.mxu0 %v520
    %862 = vmatmul.bf16.gmra.mxu0 %v813
    %v863 = vpop.f32.mrf.mxu0
    %v864 = vadd.f32 %v851, %v863
    %v865 = vpop.f32.mrf.mxu0
    %866 = vdwg.mxu0
    %867 = vmatpush.bf16.msra.mxu0 %v515
    %868 = vmatpush.bf16.msra.mxu0 %v509
    %869 = vmatpush.bf16.msra.mxu0 %v503
    %870 = vmatpush.bf16.msra.mxu0 %v497
    %871 = vmatpush.bf16.msra.mxu0 %v491
    %872 = vmatpush.bf16.msra.mxu0 %v485
    %873 = vmatpush.bf16.msra.mxu0 %v479
    %874 = vmatpush.bf16.msra.mxu0 %v473
    %875 = vmatmul.bf16.gmra.mxu0 %v810
    %v876 = vpop.f32.mrf.mxu0
    %v877 = vadd.f32 0.0, %v876
    %v878 = vpop.f32.mrf.mxu0
    %879 = vdwg.mxu0
    %880 = vmatpush.bf16.msra.mxu0 0
    %881 = vmatpush.bf16.msra.mxu0 %v557
    %882 = vmatpush.bf16.msra.mxu0 %v551
    %883 = vmatpush.bf16.msra.mxu0 %v545
    %884 = vmatpush.bf16.msra.mxu0 %v539
    %885 = vmatpush.bf16.msra.mxu0 %v533
    %886 = vmatpush.bf16.msra.mxu0 %v527
    %887 = vmatpush.bf16.msra.mxu0 %v521
    %888 = vmatmul.bf16.gmra.mxu0 %v813
    %v889 = vpop.f32.mrf.mxu0
    %v890 = vadd.f32 %v877, %v889
    %v891 = vpop.f32.mrf.mxu0
    %892 = vdwg.mxu0
    %893 = vmatpush.bf16.msra.mxu0 %v516
    %894 = vmatpush.bf16.msra.mxu0 %v510
    %895 = vmatpush.bf16.msra.mxu0 %v504
    %896 = vmatpush.bf16.msra.mxu0 %v498
    %897 = vmatpush.bf16.msra.mxu0 %v492
    %898 = vmatpush.bf16.msra.mxu0 %v486
    %899 = vmatpush.bf16.msra.mxu0 %v480
    %900 = vmatpush.bf16.msra.mxu0 %v474
    %901 = vmatmul.bf16.gmra.mxu0 %v810
    %v902 = vpop.f32.mrf.mxu0
    %v903 = vadd.f32 0.0, %v902
    %v904 = vpop.f32.mrf.mxu0
    %905 = vdwg.mxu0
    %906 = vmatpush.bf16.msra.mxu0 0
    %907 = vmatpush.bf16.msra.mxu0 %v558
    %908 = vmatpush.bf16.msra.mxu0 %v552
    %909 = vmatpush.bf16.msra.mxu0 %v546
    %910 = vmatpush.bf16.msra.mxu0 %v540
    %911 = vmatpush.bf16.msra.mxu0 %v534
    %912 = vmatpush.bf16.msra.mxu0 %v528
    %913 = vmatpush.bf16.msra.mxu0 %v522
    %914 = vmatmul.bf16.gmra.mxu0 %v813
    %v915 = vpop.f32.mrf.mxu0
    %v916 = vadd.f32 %v903, %v915
    %v917 = vpop.f32.mrf.mxu0
    %918 = vdwg.mxu0
    %919 = vmatpush.bf16.msra.mxu0 %v517
    %920 = vmatpush.bf16.msra.mxu0 %v511
    %921 = vmatpush.bf16.msra.mxu0 %v505
    %922 = vmatpush.bf16.msra.mxu0 %v499
    %923 = vmatpush.bf16.msra.mxu0 %v493
    %924 = vmatpush.bf16.msra.mxu0 %v487
    %925 = vmatpush.bf16.msra.mxu0 %v481
    %926 = vmatpush.bf16.msra.mxu0 %v475
    %927 = vmatmul.bf16.gmra.mxu0 %v810
    %v928 = vpop.f32.mrf.mxu0
    %v929 = vadd.f32 0.0, %v928
    %v930 = vpop.f32.mrf.mxu0
    %931 = vdwg.mxu0
    %932 = vmatpush.bf16.msra.mxu0 0
    %933 = vmatpush.bf16.msra.mxu0 %v559
    %934 = vmatpush.bf16.msra.mxu0 %v553
    %935 = vmatpush.bf16.msra.mxu0 %v547
    %936 = vmatpush.bf16.msra.mxu0 %v541
    %937 = vmatpush.bf16.msra.mxu0 %v535
    %938 = vmatpush.bf16.msra.mxu0 %v529
    %939 = vmatpush.bf16.msra.mxu0 %v523
    %940 = vmatmul.bf16.gmra.mxu0 %v813
    %v941 = vpop.f32.mrf.mxu0
    %v942 = vadd.f32 %v929, %v941
    %v943 = vpop.f32.mrf.mxu0
    %944 = vdwg.mxu0
    %945 = vmatpush.bf16.msra.mxu0 %v518
    %946 = vmatpush.bf16.msra.mxu0 %v512
    %947 = vmatpush.bf16.msra.mxu0 %v506
    %948 = vmatpush.bf16.msra.mxu0 %v500
    %949 = vmatpush.bf16.msra.mxu0 %v494
    %950 = vmatpush.bf16.msra.mxu0 %v488
    %951 = vmatpush.bf16.msra.mxu0 %v482
    %952 = vmatpush.bf16.msra.mxu0 %v476
    %953 = vmatmul.bf16.gmra.mxu0 %v810
    %v954 = vpop.f32.mrf.mxu0
    %v955 = vadd.f32 0.0, %v954
    %v956 = vpop.f32.mrf.mxu0
    %957 = vdwg.mxu0
    %958 = vmatpush.bf16.msra.mxu0 0
    %959 = vmatpush.bf16.msra.mxu0 %v560
    %960 = vmatpush.bf16.msra.mxu0 %v554
    %961 = vmatpush.bf16.msra.mxu0 %v548
    %962 = vmatpush.bf16.msra.mxu0 %v542
    %963 = vmatpush.bf16.msra.mxu0 %v536
    %964 = vmatpush.bf16.msra.mxu0 %v530
    %965 = vmatpush.bf16.msra.mxu0 %v524
    %966 = vmatmul.bf16.gmra.mxu0 %v813
    %v967 = vpop.f32.mrf.mxu0
    %v968 = vadd.f32 %v955, %v967
    %v969 = vpop.f32.mrf.mxu0
    %970 = vdwg.mxu0
    %v971 = vmul.f32 %v677, %v677
    %v972 = vmul.f32 %v703, %v703
    %v973 = vmul.f32 %v729, %v729
    %v974 = vmul.f32 %v755, %v755
    %v975 = vmul.f32 %v781, %v781
    %v976 = vmul.f32 %v807, %v807
    %v977 = vadd.f32 %v971, %v974
    %v978 = vadd.f32 %v972, %v975
    %v979 = vadd.f32 %v973, %v976
    %v980 = vmul.f32 %v838, %v838
    %v981 = vmul.f32 %v864, %v864
    %v982 = vmul.f32 %v890, %v890
    %v983 = vmul.f32 %v916, %v916
    %v984 = vmul.f32 %v942, %v942
    %v985 = vmul.f32 %v968, %v968
    %v986 = vadd.f32 %v980, %v983
    %v987 = vadd.f32 %v981, %v984
    %v988 = vadd.f32 %v982, %v985
    %v989 = vld [vmem:[%s3] ss:$8 sm:$0x7]
    %v990 = vmax.f32 %v977, %v978
    %v991 = vmax.f32 %v990, %v979
    %992 = vmax.xlane.f32.xlu0 %v991
    %v993 = vpop.xlane.xlu0 %992
    %vm994 = vcmp.ge.f32.partialorder %v977, %v993
    %vm995 = vcmp.ge.f32.partialorder %v978, %v993
    %vm996 = vcmp.ge.f32.partialorder %v979, %v993
    %v998 = vperm.slane %v989, 0
    %v999 = vperm.slane %v989, 1
    %v1000 = vperm.slane %v989, 2
    %v1004 = vsel %vm994, %v998, 1e+09
    %v1005 = vsel %vm995, %v999, 1e+09
    %v1006 = vsel %vm996, %v1000, 1e+09
    %v1007 = vmin.f32 %v1004, %v1005
    %v1008 = vmin.f32 %v1007, %v1006
    %1009 = vmin.xlane.f32.xlu0 %v1008
    %v1010 = vpop.xlane.xlu0 %1009
    %v1011 = vsub.f32 %v1010, 0.1
    %vm1012 = vcmp.ge.f32.partialorder %v998, %v1011
    %vm1013 = vcmp.ge.f32.partialorder %v999, %v1011
    %vm1014 = vcmp.ge.f32.partialorder %v1000, %v1011
    %v1015 = vadd.f32 %v1010, 0.1
    %vm1016 = vcmp.le.f32.partialorder %v998, %v1015
    %vm1017 = vcmp.le.f32.partialorder %v999, %v1015
    %vm1018 = vcmp.le.f32.partialorder %v1000, %v1015
    %vm1019 = vmand %vm1012, %vm1016
    %vm1020 = vmand %vm1013, %vm1017
    %vm1021 = vmand %vm1014, %vm1018
    %v1022 = vmul.f32 %v1010, 2.0
    %v1023 = vsub.f32 %v1022, 0.2
    %vm1024 = vcmp.ge.f32.partialorder %v998, %v1023
    %vm1025 = vcmp.ge.f32.partialorder %v999, %v1023
    %vm1026 = vcmp.ge.f32.partialorder %v1000, %v1023
    %v1027 = vadd.f32 %v1022, 0.2
    %vm1028 = vcmp.le.f32.partialorder %v998, %v1027
    %vm1029 = vcmp.le.f32.partialorder %v999, %v1027
    %vm1030 = vcmp.le.f32.partialorder %v1000, %v1027
    %vm1031 = vmand %vm1024, %vm1028
    %vm1032 = vmand %vm1025, %vm1029
    %vm1033 = vmand %vm1026, %vm1030
    %vm1034 = vmor %vm1019, %vm1031
    %vm1035 = vmor %vm1020, %vm1032
    %vm1036 = vmor %vm1021, %vm1033
    %v1037 = vsel %vm1034, %v986, 0.0
    %v1038 = vsel %vm1035, %v987, 0.0
    %v1039 = vsel %vm1036, %v988, 0.0
    %v1040 = vadd.f32 %v1037, %v1038
    %v1041 = vadd.f32 %v1040, %v1039
    %1042 = vadd.xlane.f32.xlu0 %v1041
    %v1043 = vpop.xlane.xlu0 %1042
    %v1044 = vadd.f32 %v986, %v987
    %v1045 = vadd.f32 %v1044, %v988
    %1046 = vadd.xlane.f32.xlu0 %v1045
    %v1047 = vpop.xlane.xlu0 %1046
    %v1048 = vsub.f32 %v1047, %v1043
    %v1049 = vrcp.pop %v1048
    %v1050 = vmul.f32 %v1048, %v1049
    %v1051 = vsub.f32 1.0, %v1050
    %v1052 = vmul.f32 %v1049, %v1051
    %v1053 = vadd.f32 %v1049, %v1052
    %vm1054 = vweird.f32 %v1048
    %vm1055 = vweird.f32 %v1049
    %vm1056 = vmor %vm1054, %vm1055
    %v1057 = vsel %vm1056, %v1049, %v1053
    %v1058 = vand.u32 2147483647, %v1048
    %vm1059 = vcmp.eq.f32.partialorder %v1058, 8.507059e+37
    %v1060 = vand.u32 %v1048, 2147483648
    %v1061 = vor.u32 1.1754944e-38, %v1060
    %v1062 = vsel %vm1059, %v1061, %v1057
    %v1063 = vmul.f32 %v1043, %v1062
    %v1064 = vlog2.pop %v1063
    %v1065 = vmul.f32 %v1064, 0.6931472
    %v1066 = vmul.f32 %v1065, 0.4342945
    %v1067 = vlaneseq
    %v1068 = vshrl.u32 %v1067, 7
    %s1069 = smul.u32 0, 8
    %v1070 = vstv %s1069
    %v1071 = vadd.s32 %v1068, %v1070
    %vm1072 = vcmp.lt.s32.totalorder %v1071, 2
    %v1073 = vsel %vm1072, %v1066, 0.0
    %v1074 = vrot.slane %v1073, 4
    %v1075 = vadd.f32 %v1073, %v1074
    %v1076 = vrot.slane %v1075, 2
    %v1077 = vadd.f32 %v1075, %v1076
    %v1078 = vrot.slane %v1077, 1
    %v1079 = vadd.f32 %v1077, %v1078
    %vm1080 = vcmp.eq.s32.totalorder %v1068, 0
    %v1081 = vsel %vm1080, %v52, 0.0
    %vm1082 = vcmp.eq.s32.totalorder %v1068, 1
    %v1083 = vsel %vm1082, %v62, %v1081
    %vm1084 = vcmp.eq.s32.totalorder %v1068, 2
    %v1085 = vsel %vm1084, %v72, %v1083
    %vm1086 = vcmp.eq.s32.totalorder %v1068, 3
    %v1087 = vsel %vm1086, %v84, %v1085
    %vm1088 = vcmp.eq.s32.totalorder %v1068, 4
    %v1089 = vsel %vm1088, %v96, %v1087
    %vm1090 = vcmp.eq.s32.totalorder %v1068, 5
    %v1091 = vsel %vm1090, %v108, %v1089
    %vm1092 = vcmp.eq.s32.totalorder %v1068, 6
    %v1093 = vsel %vm1092, %v1079, %v1091
    %1094 = vst [vmem:[%s4] sm:$0xff] %v1093
    // Predicated region
    $region22: #{_combined_loss.1} parent=1 // pred_check
      _
    $region23: #{_combined_loss.1} parent=1 // pred_check_branch
      %1096 = sbr.rel (0) target = $region25
    $region24: #{_combined_loss.1} parent=1 // pred_region
      _
    $region25: #{_combined_loss.1} parent=1 // pred_fallthru
      _
    // Predicated region
    $region26: #{_combined_loss.1} parent=1 // pred_check
      _
    $region27: #{_combined_loss.1} parent=1 // pred_check_branch
      %1098 = sbr.rel (0) target = $region29
    $region28: #{_combined_loss.1} parent=1 // pred_region
      _
    $region29: #{_combined_loss.1} parent=1 // pred_fallthru
      _
    %1099 = vsyncpa [#allocation3], 1

</llo_original>
